<compile_context>
chip_gen: v7x
topology: tpu7x:2x2x1
jax: 0.10.0
libtpu: 0.0.40
codegen_flags: <defaults>
</compile_context>

<pallas_src>
import jax
import jax.numpy as jnp
from jax.experimental import pallas as pl
from jax.experimental.pallas import tpu as pltpu

_LANES = 128


def _round_up(x, m):
    return (x + m - 1) // m * m


def _choose_spatial_tile(hw, tb, c, itemsize, budget_bytes=8 * 1024 * 1024):
    """Pick the spatial (lane) tile for x.

    Largest multiple-of-128 divisor of `hw` whose double-buffered x block stays
    under `budget_bytes` (sized for v7x's 64 MiB physical VMEM; also safe on
    v5e's small scoped default together with the explicit vmem limit below).
    Prefers >= 2 spatial chunks so the DMA for chunk i+1 overlaps compute on i.
    """
    if hw % 128 != 0:
        return hw  # full-extent block is always layout-legal
    divisors = [t for t in range(128, hw + 1, 128) if hw % t == 0]
    fitting = [t for t in divisors if 2 * tb * c * t * itemsize <= budget_bytes]
    if not fitting:
        return 128
    fitting.sort()
    ts = fitting[-1]
    if ts == hw and len(fitting) > 1:
        ts = fitting[-2]  # >= 2 chunks -> pipelined DMA/compute overlap
    return ts


def _make_age_loss_kernel(n_classes, hw_total):
    inv_hw = 1.0 / float(hw_total)
    inv_k = 1.0 / float(n_classes)

    def kernel(x_ref, w_ref, b_ref, y_ref, logits_ref, loss_ref, acc_ref):
        # x_ref:      [tb, C, ts]  one spatial chunk of this batch tile
        # w_ref:      [C, Kp]      padded classifier weight
        # b_ref:      [1, Kp]      padded classifier bias
        # y_ref:      [tb, Kp]     padded float BCE targets
        # logits_ref: [tb, Kp]     per-sample logits (lane-dense output)
        # loss_ref:   [tb, 128]    per-sample clamped loss, broadcast on lanes
        # acc_ref:    [tb, C]      f32 running spatial sum (VMEM scratch)
        s = pl.program_id(1)

        @pl.when(s == 0)
        def _init():
            acc_ref[...] = jnp.zeros_like(acc_ref)

        # Partial spatial sum for this chunk (XLU lane reduction), f32 accum.
        x = x_ref[...].astype(jnp.float32)
        acc_ref[...] += jnp.sum(x, axis=-1)

        @pl.when(s == pl.num_programs(1) - 1)
        def _finalize():
            feat = acc_ref[...] * inv_hw                       # [tb, C] mean
            c_dim = feat.shape[1]

            # Tiny-C synthetic head on the VPU (MXU would be >99% idle for a
            # 2x4xK contraction).  For realistic C (>=128) replace with:
            #   jnp.dot(feat, w, preferred_element_type=jnp.float32)
            w = w_ref[...].astype(jnp.float32)                 # [C, Kp]
            logits = feat[:, 0:1] * w[0:1, :]
            for c in range(1, c_dim):
                logits = logits + feat[:, c:c + 1] * w[c:c + 1, :]
            logits = logits + b_ref[...].astype(jnp.float32)   # [tb, Kp]

            # BCEWithLogits (mean over the K real classes), numerically stable:
            #   max(z, 0) - z*y + log(1 + exp(-|z|))
            y = y_ref[...].astype(jnp.float32)
            per_elem = (jnp.maximum(logits, 0.0) - logits * y
                        + jnp.log(1.0 + jnp.exp(-jnp.abs(logits))))
            valid = (jax.lax.broadcasted_iota(jnp.int32, per_elem.shape, 1)
                     < n_classes)
            per_elem = jnp.where(valid, per_elem, 0.0)
            per_sample = jnp.sum(per_elem, axis=-1, keepdims=True) * inv_k
            per_sample = jnp.maximum(per_sample, 1e-5)         # clamp(min=1e-5)

            logits_ref[...] = logits
            # Lane-dense store: broadcast the per-sample loss across 128 lanes.
            loss_ref[...] = jnp.broadcast_to(per_sample, loss_ref.shape)

    return kernel


def age_loss(x, age_class, w, b):
    """Pallas AgeLoss.

    x:         [B, C, H, W] (NCHW; f32 or bf16 -- upcast to f32 in-kernel)
    age_class: [B, K] float BCE targets
    w, b:      synthetic classifier head parameters ([C, K], [K])
    Returns (loss_scalar, x_age[0]).
    """
    B, C, H, W = x.shape
    K = w.shape[1]
    HW = H * W
    Kp = _round_up(K, _LANES)

    x_flat = x.reshape(B, C, HW)
    w_pad = jnp.zeros((C, Kp), jnp.float32).at[:, :K].set(w.astype(jnp.float32))
    b_pad = jnp.zeros((1, Kp), jnp.float32).at[0, :K].set(b.astype(jnp.float32))
    y_pad = jnp.zeros((B, Kp), jnp.float32).at[:, :K].set(
        age_class.astype(jnp.float32))

    # Batch tile: full batch when small; multiples of 8 keep 2-D output blocks
    # layout-legal and let the batch axis shard across v7x's two TensorCores.
    tb = 8 if (B > 8 and B % 8 == 0) else B
    ts = _choose_spatial_tile(HW, tb, C, x_flat.dtype.itemsize)
    grid = (B // tb, HW // ts)

    kernel = _make_age_loss_kernel(K, HW)

    logits_pad, loss_lanes = pl.pallas_call(
        kernel,
        grid=grid,
        in_specs=[
            pl.BlockSpec((tb, C, ts), lambda bi, si: (bi, 0, si)),
            pl.BlockSpec((C, Kp), lambda bi, si: (0, 0)),
            pl.BlockSpec((1, Kp), lambda bi, si: (0, 0)),
            pl.BlockSpec((tb, Kp), lambda bi, si: (bi, 0)),
        ],
        out_specs=[
            pl.BlockSpec((tb, Kp), lambda bi, si: (bi, 0)),
            pl.BlockSpec((tb, _LANES), lambda bi, si: (bi, 0)),
        ],
        out_shape=[
            jax.ShapeDtypeStruct((B, Kp), jnp.float32),
            jax.ShapeDtypeStruct((B, _LANES), jnp.float32),
        ],
        scratch_shapes=[pltpu.VMEM((tb, C), jnp.float32)],
        compiler_params=pltpu.CompilerParams(
            dimension_semantics=("parallel", "arbitrary"),
            vmem_limit_bytes=32 * 1024 * 1024,
        ),
    )(x_flat, w_pad, b_pad, y_pad)

    per_sample = loss_lanes[:, 0]          # already clamped in-kernel
    loss = jnp.sum(per_sample)             # trivial batch sum in the wrapper
    return loss, logits_pad[0, :K]


def _reference(x, age_class, w, b):
    # Pure-JAX reference mirroring the PyTorch semantics.  The contraction is
    # written as broadcast-multiply + sum so the check runs in exact f32 (the
    # TPU default-precision matmul would otherwise inject bf16 rounding).
    B = x.shape[0]
    feat = jnp.mean(x.astype(jnp.float32).reshape(B, x.shape[1], -1), axis=-1)
    logits = jnp.sum(feat[:, :, None] * w.astype(jnp.float32)[None, :, :],
                     axis=1) + b.astype(jnp.float32)
    per_elem = (jnp.maximum(logits, 0.0) - logits * age_class
                + jnp.log(1.0 + jnp.exp(-jnp.abs(logits))))
    per_sample = jnp.maximum(jnp.mean(per_elem, axis=-1), 1e-5)
    return jnp.sum(per_sample), logits[0]


if __name__ == "__main__":
    B, C, H, W, K = 2, 4, 16, 16, 8   # batch, channels, spatial, age classes

    key = jax.random.PRNGKey(0)
    k_x, k_w, k_b, k_y = jax.random.split(key, 4)

    x = jax.random.normal(k_x, (B, C, H, W), dtype=jnp.float32)
    # Deterministic synthetic classifier parameters.
    w = jax.random.normal(k_w, (C, K), dtype=jnp.float32) * 0.1
    b = jax.random.normal(k_b, (K,), dtype=jnp.float32) * 0.01
    # One-hot float age targets (BCEWithLogitsLoss takes float targets).
    age_idx = jax.random.randint(k_y, (B,), 0, K)
    age_class = jax.nn.one_hot(age_idx, K, dtype=jnp.float32)

    loss, x_age0 = age_loss(x, age_class, w, b)
    loss = jax.block_until_ready(loss)
    x_age0 = jax.block_until_ready(x_age0)

    ref_loss, ref_logits0 = _reference(x, age_class, w, b)
    assert jnp.allclose(loss, ref_loss, atol=1e-5, rtol=1e-5), (loss, ref_loss)
    assert jnp.allclose(x_age0, ref_logits0, atol=1e-5, rtol=1e-5)

    print("KERNEL_OK")
</pallas_src>

<mosaic_0001>
module attributes {stable_mosaic.version = 11 : i64} {
  func.func @kernel(%arg0: i32, %arg1: i32, %arg2: memref<2x4x128xf32, #tpu.memory_space<vmem>>, %arg3: memref<4x128xf32, #tpu.memory_space<vmem>>, %arg4: memref<1x128xf32, #tpu.memory_space<vmem>>, %arg5: memref<2x128xf32, #tpu.memory_space<vmem>>, %arg6: memref<2x128xf32, #tpu.memory_space<vmem>>, %arg7: memref<2x128xf32, #tpu.memory_space<vmem>>, %arg8: memref<2x4xf32, #tpu.memory_space<vmem>>) attributes {dimension_semantics = [#tpu.dimension_semantics<parallel>, #tpu.dimension_semantics<arbitrary>], iteration_bounds = array<i64: 1, 2>, scalar_prefetch = 0 : i64, scratch_operands = 1 : i64, tpu.core_type = #tpu.core_type<tc>, window_params = [{transform_indices = @transform_0, window_bounds = array<i64: 2, 4, 128>}, {pipeline_mode = #tpu.pipeline_mode<synchronous>, transform_indices = @transform_1, window_bounds = array<i64: 4, 128>}, {pipeline_mode = #tpu.pipeline_mode<synchronous>, transform_indices = @transform_2, window_bounds = array<i64: 1, 128>}, {transform_indices = @transform_3, window_bounds = array<i64: 2, 128>}, {transform_indices = @transform_4, window_bounds = array<i64: 2, 128>}, {transform_indices = @transform_5, window_bounds = array<i64: 2, 128>}]} {
    %c0_i32 = arith.constant 0 : i32
    %0 = arith.cmpi eq, %arg1, %c0_i32 : i32
    %1 = arith.extui %0 : i1 to i32
    %c0_i32_0 = arith.constant 0 : i32
    %2 = arith.cmpi ne, %1, %c0_i32_0 : i32
    scf.if %2 {
      %cst_8 = arith.constant 0.000000e+00 : f32
      %11 = vector.broadcast %cst_8 : f32 to vector<2x4xf32>
      %c0_9 = arith.constant 0 : index
      %c0_10 = arith.constant 0 : index
      %12 = vector.load %arg8[%c0_9, %c0_10] : memref<2x4xf32, #tpu.memory_space<vmem>>, vector<2x4xf32>
      tpu.vector_store %arg8[%c0_9, %c0_10], %11 {strides = array<i32>} : memref<2x4xf32, #tpu.memory_space<vmem>>, vector<2x4xf32>,
    } else {
    }
    %c0 = arith.constant 0 : index
    %c0_1 = arith.constant 0 : index
    %c0_2 = arith.constant 0 : index
    %3 = vector.load %arg2[%c0, %c0_1, %c0_2] : memref<2x4x128xf32, #tpu.memory_space<vmem>>, vector<2x4x128xf32>
    %c0_3 = arith.constant 0 : index
    %c0_4 = arith.constant 0 : index
    %4 = vector.load %arg8[%c0_3, %c0_4] : memref<2x4xf32, #tpu.memory_space<vmem>>, vector<2x4xf32>
    %cst = arith.constant dense<0.000000e+00> : vector<2x4xf32>
    %5 = vector.multi_reduction <add>, %3, %cst [2] : vector<2x4x128xf32> to vector<2x4xf32>
    %6 = arith.addf %4, %5 : vector<2x4xf32>
    %c0_5 = arith.constant 0 : index
    %c0_6 = arith.constant 0 : index
    %7 = vector.load %arg8[%c0_5, %c0_6] : memref<2x4xf32, #tpu.memory_space<vmem>>, vector<2x4xf32>
    tpu.vector_store %arg8[%c0_5, %c0_6], %6 {strides = array<i32>} : memref<2x4xf32, #tpu.memory_space<vmem>>, vector<2x4xf32>,
    %c1_i32 = arith.constant 1 : i32
    %8 = arith.cmpi eq, %arg1, %c1_i32 : i32
    %9 = arith.extui %8 : i1 to i32
    %c0_i32_7 = arith.constant 0 : i32
    %10 = arith.cmpi ne, %9, %c0_i32_7 : i32
    scf.if %10 {
      %c0_8 = arith.constant 0 : index
      %c0_9 = arith.constant 0 : index
      %11 = vector.load %arg8[%c0_8, %c0_9] : memref<2x4xf32, #tpu.memory_space<vmem>>, vector<2x4xf32>
      %cst_10 = arith.constant 3.906250e-03 : f32
      %12 = vector.broadcast %cst_10 : f32 to vector<2x4xf32>
      %13 = arith.mulf %11, %12 : vector<2x4xf32>
      %c0_11 = arith.constant 0 : index
      %c0_12 = arith.constant 0 : index
      %14 = vector.load %arg3[%c0_11, %c0_12] : memref<4x128xf32, #tpu.memory_space<vmem>>, vector<4x128xf32>
      %15 = vector.extract_strided_slice %13 {offsets = [0, 0], sizes = [2, 1], strides = [1, 1]} : vector<2x4xf32> to vector<2x1xf32>
      %16 = vector.extract_strided_slice %14 {offsets = [0, 0], sizes = [1, 128], strides = [1, 1]} : vector<4x128xf32> to vector<1x128xf32>
      %17 = vector.broadcast %15 : vector<2x1xf32> to vector<2x128xf32>
      %18 = vector.broadcast %16 : vector<1x128xf32> to vector<2x128xf32>
      %19 = arith.mulf %17, %18 : vector<2x128xf32>
      %20 = vector.extract_strided_slice %13 {offsets = [0, 1], sizes = [2, 1], strides = [1, 1]} : vector<2x4xf32> to vector<2x1xf32>
      %21 = vector.extract_strided_slice %14 {offsets = [1, 0], sizes = [1, 128], strides = [1, 1]} : vector<4x128xf32> to vector<1x128xf32>
      %22 = vector.broadcast %20 : vector<2x1xf32> to vector<2x128xf32>
      %23 = vector.broadcast %21 : vector<1x128xf32> to vector<2x128xf32>
      %24 = arith.mulf %22, %23 : vector<2x128xf32>
      %25 = arith.addf %19, %24 : vector<2x128xf32>
      %26 = vector.extract_strided_slice %13 {offsets = [0, 2], sizes = [2, 1], strides = [1, 1]} : vector<2x4xf32> to vector<2x1xf32>
      %27 = vector.extract_strided_slice %14 {offsets = [2, 0], sizes = [1, 128], strides = [1, 1]} : vector<4x128xf32> to vector<1x128xf32>
      %28 = vector.broadcast %26 : vector<2x1xf32> to vector<2x128xf32>
      %29 = vector.broadcast %27 : vector<1x128xf32> to vector<2x128xf32>
      %30 = arith.mulf %28, %29 : vector<2x128xf32>
      %31 = arith.addf %25, %30 : vector<2x128xf32>
      %32 = vector.extract_strided_slice %13 {offsets = [0, 3], sizes = [2, 1], strides = [1, 1]} : vector<2x4xf32> to vector<2x1xf32>
      %33 = vector.extract_strided_slice %14 {offsets = [3, 0], sizes = [1, 128], strides = [1, 1]} : vector<4x128xf32> to vector<1x128xf32>
      %34 = vector.broadcast %32 : vector<2x1xf32> to vector<2x128xf32>
      %35 = vector.broadcast %33 : vector<1x128xf32> to vector<2x128xf32>
      %36 = arith.mulf %34, %35 : vector<2x128xf32>
      %37 = arith.addf %31, %36 : vector<2x128xf32>
      %c0_13 = arith.constant 0 : index
      %c0_14 = arith.constant 0 : index
      %38 = vector.load %arg4[%c0_13, %c0_14] : memref<1x128xf32, #tpu.memory_space<vmem>>, vector<1x128xf32>
      %39 = vector.broadcast %38 : vector<1x128xf32> to vector<2x128xf32>
      %40 = arith.addf %37, %39 : vector<2x128xf32>
      %c0_15 = arith.constant 0 : index
      %c0_16 = arith.constant 0 : index
      %41 = vector.load %arg5[%c0_15, %c0_16] : memref<2x128xf32, #tpu.memory_space<vmem>>, vector<2x128xf32>
      %cst_17 = arith.constant 0.000000e+00 : f32
      %42 = vector.broadcast %cst_17 : f32 to vector<2x128xf32>
      %43 = arith.maximumf %40, %42 : vector<2x128xf32>
      %44 = arith.mulf %40, %41 : vector<2x128xf32>
      %45 = arith.subf %43, %44 : vector<2x128xf32>
      %46 = math.absf %40 : vector<2x128xf32>
      %cst_18 = arith.constant 0.000000e+00 : f32
      %47 = vector.broadcast %cst_18 : f32 to vector<2x128xf32>
      %48 = arith.subf %47, %46 : vector<2x128xf32>
      %49 = math.exp %48 : vector<2x128xf32>
      %cst_19 = arith.constant 1.000000e+00 : f32
      %50 = vector.broadcast %cst_19 : f32 to vector<2x128xf32>
      %51 = arith.addf %50, %49 : vector<2x128xf32>
      %52 = math.log %51 : vector<2x128xf32>
      %53 = arith.addf %45, %52 : vector<2x128xf32>
      %54 = tpu.iota {dimensions = array<i32: 1>} : vector<2x128xi32>
      %c8_i32 = arith.constant 8 : i32
      %55 = vector.broadcast %c8_i32 : i32 to vector<2x128xi32>
      %56 = arith.cmpi slt, %54, %55 : vector<2x128xi32>
      %cst_20 = arith.constant 0.000000e+00 : f32
      %57 = vector.broadcast %cst_20 : f32 to vector<2x128xf32>
      %58 = arith.select %56, %53, %57 : vector<2x128xi1>, vector<2x128xf32>
      %cst_21 = arith.constant dense<0.000000e+00> : vector<2xf32>
      %59 = vector.multi_reduction <add>, %58, %cst_21 [1] : vector<2x128xf32> to vector<2xf32>
      %60 = vector.shape_cast %59 : vector<2xf32> to vector<2x1xf32>
      %cst_22 = arith.constant 1.250000e-01 : f32
      %61 = vector.broadcast %cst_22 : f32 to vector<2x1xf32>
      %62 = arith.mulf %60, %61 : vector<2x1xf32>
      %cst_23 = arith.constant 9.99999974E-6 : f32
      %63 = vector.broadcast %cst_23 : f32 to vector<2x1xf32>
      %64 = arith.maximumf %62, %63 : vector<2x1xf32>
      %c0_24 = arith.constant 0 : index
      %c0_25 = arith.constant 0 : index
      %65 = vector.load %arg6[%c0_24, %c0_25] : memref<2x128xf32, #tpu.memory_space<vmem>>, vector<2x128xf32>
      tpu.vector_store %arg6[%c0_24, %c0_25], %40 {strides = array<i32>} : memref<2x128xf32, #tpu.memory_space<vmem>>, vector<2x128xf32>,
      %66 = vector.shape_cast %64 : vector<2x1xf32> to vector<2x1xf32>
      %67 = vector.broadcast %66 : vector<2x1xf32> to vector<2x128xf32>
      %c0_26 = arith.constant 0 : index
      %c0_27 = arith.constant 0 : index
      %68 = vector.load %arg7[%c0_26, %c0_27] : memref<2x128xf32, #tpu.memory_space<vmem>>, vector<2x128xf32>
      tpu.vector_store %arg7[%c0_26, %c0_27], %67 {strides = array<i32>} : memref<2x128xf32, #tpu.memory_space<vmem>>, vector<2x128xf32>,
    } else {
    }
    return
  }
  func.func @transform_0(%arg0: i32, %arg1: i32) -> (i32, i32, i32) {
    %c0_i32 = arith.constant 0 : i32
    %c0_i32_0 = arith.constant 0 : i32
    return %arg0, %c0_i32, %arg1 : i32, i32, i32
  }
  func.func @transform_1(%arg0: i32, %arg1: i32) -> (i32, i32) {
    %c0_i32 = arith.constant 0 : i32
    %c0_i32_0 = arith.constant 0 : i32
    %c0_i32_1 = arith.constant 0 : i32
    return %c0_i32, %c0_i32_0 : i32, i32
  }
  func.func @transform_2(%arg0: i32, %arg1: i32) -> (i32, i32) {
    %c0_i32 = arith.constant 0 : i32
    %c0_i32_0 = arith.constant 0 : i32
    %c0_i32_1 = arith.constant 0 : i32
    return %c0_i32, %c0_i32_0 : i32, i32
  }
  func.func @transform_3(%arg0: i32, %arg1: i32) -> (i32, i32) {
    %c0_i32 = arith.constant 0 : i32
    %c0_i32_0 = arith.constant 0 : i32
    return %arg0, %c0_i32 : i32, i32
  }
  func.func @transform_4(%arg0: i32, %arg1: i32) -> (i32, i32) {
    %c0_i32 = arith.constant 0 : i32
    %c0_i32_0 = arith.constant 0 : i32
    return %arg0, %c0_i32 : i32, i32
  }
  func.func @transform_5(%arg0: i32, %arg1: i32) -> (i32, i32) {
    %c0_i32 = arith.constant 0 : i32
    %c0_i32_0 = arith.constant 0 : i32
    return %arg0, %c0_i32 : i32, i32
  }
}

</mosaic_0001>

<llo_original>
// kernel: tpu_custom_call.1
$region0: #{tpu_custom_call.1}
  #allocation0 [shape = 'u32[]', space=smem, size = 0x4, offset = 0x4, fixed_abs, tag = 'smem constant byte address 0x4 - core index']
  #allocation1 [shape = 'u32[144,128]{1,0:T(1,128)}', space=vmem, size = 0x12000, scoped, tag = 'internal scratch']
  #allocation2 [shape = 'f32[2,4]{1,0:T(2,128)}', space=vmem, size = 0x400, scoped, tag = 'scratch operand']
  %s0 = inlined_call_operand.hbm [shape: f32[2,4,256], index: 0, kind: input, shape index: {}]
  %s1 = inlined_call_operand.hbm [shape: f32[4,128], index: 1, kind: input, shape index: {}]
  %s2 = inlined_call_operand.vmem [shape: f32[1,128], index: 2, kind: input, shape index: {}]
  %s3 = inlined_call_operand.vmem [shape: f32[2,128], index: 3, kind: input, shape index: {}]
  %s4 = inlined_call_operand.hbm [shape: f32[2,128], index: 4, kind: output, shape index: {0}]
  %s5 = inlined_call_operand.hbm [shape: f32[2,128], index: 5, kind: output, shape index: {1}]
  %6 = xla_tuple %s4, %s5
  %s7 = sld [smem:[#allocation0]]
  $region73: #{tpu_custom_call.1} parent=0
    _
  %s9 = ssub.s32 1, %s7
  %s10 = scalar_select 0, %s9, %s7
  $region1: #{tpu_custom_call.1} parent=0
    #allocation3 [shape = 'u8[8192]{0}', space=vmem, size = 0x2000, scoped, tag = 'input window, operand 0']
    #allocation4 [shape = 's32[2]{0}', space=sflag, size = 0x8, scoped, tag = 'scoped memory for tpu_custom_call.1']
    #allocation5 [shape = 's32[2]{0}', space=sflag, size = 0x8, scoped, tag = 'scoped memory for tpu_custom_call.1']
    #allocation6 [shape = 'u8[2048]{0}', space=vmem, size = 0x800, scoped, tag = 'input window, operand 1, single buffered']
    #allocation7 [shape = 's32[1]{0}', space=sflag, size = 0x4, scoped, tag = 'scoped memory for tpu_custom_call.1']
    #allocation8 [shape = 'u8[1024]{0}', space=vmem, size = 0x400, scoped, tag = 'output window, operand 0, single buffered']
    #allocation9 [shape = 'u8[1024]{0}', space=vmem, size = 0x400, scoped, tag = 'output window, operand 1, single buffered']
    #allocation10 [shape = 's32[1]{0}', space=sflag, size = 0x4, scoped, tag = 'scoped memory for tpu_custom_call.1']
    %11 = vsyncpa [#allocation4], 0
    %s12 = scalar_lea.sflag [#allocation4], 1
    %13 = vsyncpa %s12, 0
    %14 = vsyncpa [#allocation7], 0
    %15 = vsyncpa [#allocation5], 0
    %16 = vsyncpa [#allocation10], 0
    loop: start=0, step=1, limit=4
    $region2: #{tpu_custom_call.1} parent=1 // loop_pre_header
      _
    $region3: #{tpu_custom_call.1} parent=1 // loop_header
      %s18 = sphi 0, %s22
      %p19 = scmp.ge.s32.totalorder %s18, 4
      %s25 = sphi 0, %s37
      %s26 = sphi 0, %s33
      %s27 = sphi 0, %s25
      %s28 = sphi 0, %s26
      %s29 = sphi 0, %s27
      %s30 = sphi 0, %s28
      %s42 = sphi 0, %s44
      %s45 = sphi 0, %s42
      %s46 = sphi 0, %s45
      %s62 = sphi 0, %s46
      %s66 = sphi 0, %s66
      %s68 = sphi 0, %s66
      %s69 = sphi 0, %s68
      %s83 = sphi 0, %s69
      %s87 = sphi 0, %s87
      %s89 = sphi 0, %s87
      %s90 = sphi 0, %s89
      %s104 = sphi 0, %s90
      %s110 = sphi 0, %s112
      %s113 = sphi 0, %s110
      %s114 = sphi 0, %s113
      %s130 = sphi 0, %s114
      %s136 = sphi 0, %s138
      %s139 = sphi 0, %s136
      %s140 = sphi 0, %s139
      %s156 = sphi 0, %s140
      %s162 = sphi 0, %s164
      %s165 = sphi 0, %s162
      %s166 = sphi 0, %s165
      %s182 = sphi 0, %s166
    $region4: #{tpu_custom_call.1} parent=1 // loop_header_branch
      %21 = sbr.rel (%p19) target = $region8
    $region5: #{tpu_custom_call.1} parent=1 // loop_body
      %s23 = ssub.s32 %s18, 1
      %s24 = ssub.s32 %s18, 2
      %s31 = sadd.s32 1, %s26
      %p32 = scmp.ge.s32.totalorder %s31, 2
      %s33 = scalar_select %p32, 0, %s31
      %s34 = sadd.s32 1, %s25
      %s35 = scalar_select %p32, %s34, %s25
      %p36 = scmp.ge.s32.totalorder %s35, 1
      %s37 = scalar_select %p36, 0, %s35
      %s38 = ssub.s32 %s25, %s37
      %s39 = ssub.s32 %s26, %s33
      %s40 = sor.u32 %s38, %s39
      %p41 = scmp.eq.s32.totalorder %s40, 0
      %s43 = sadd.s32 %s42, 1
      %s44 = scalar_select %p41, %s42, %s43
      %p47 = pneg %p41
      %p48 = scmp.eq.s32.totalorder %s18, 1
      %p49 = por %p47, %p48
      %p50 = scmp.ne.s32.totalorder %s42, %s45
      %p51 = scmp.eq.s32.totalorder %s18, 0
      %p52 = por %p50, %p51
      %p53 = scmp.ne.s32.totalorder %s42, %s45
      %p54 = scmp.eq.s32.totalorder %s23, 1
      %p55 = por %p53, %p54
      %p56 = scmp.ne.s32.totalorder %s45, %s46
      %p57 = scmp.eq.s32.totalorder %s23, 0
      %p58 = por %p56, %p57
      %p59 = scmp.ne.s32.totalorder %s45, %s46
      %p60 = scmp.eq.s32.totalorder %s24, 1
      %p61 = por %p59, %p60
      %p63 = scmp.ne.s32.totalorder %s46, %s62
      %p64 = scmp.eq.s32.totalorder %s24, 0
      %p65 = por %p63, %p64
      %s67 = sadd.s32 %s66, 1
      %p70 = scmp.eq.s32.totalorder %s18, 1
      %p71 = scmp.ne.s32.totalorder %s66, %s68
      %p72 = scmp.eq.s32.totalorder %s18, 0
      %p73 = por %p71, %p72
      %p74 = scmp.ne.s32.totalorder %s66, %s68
      %p75 = scmp.eq.s32.totalorder %s23, 1
      %p76 = por %p74, %p75
      %p77 = scmp.ne.s32.totalorder %s68, %s69
      %p78 = scmp.eq.s32.totalorder %s23, 0
      %p79 = por %p77, %p78
      %p80 = scmp.ne.s32.totalorder %s68, %s69
      %p81 = scmp.eq.s32.totalorder %s24, 1
      %p82 = por %p80, %p81
      %p84 = scmp.ne.s32.totalorder %s69, %s83
      %p85 = scmp.eq.s32.totalorder %s24, 0
      %p86 = por %p84, %p85
      %s88 = sadd.s32 %s87, 1
      %p91 = scmp.eq.s32.totalorder %s18, 1
      %p92 = scmp.ne.s32.totalorder %s87, %s89
      %p93 = scmp.eq.s32.totalorder %s18, 0
      %p94 = por %p92, %p93
      %p95 = scmp.ne.s32.totalorder %s87, %s89
      %p96 = scmp.eq.s32.totalorder %s23, 1
      %p97 = por %p95, %p96
      %p98 = scmp.ne.s32.totalorder %s89, %s90
      %p99 = scmp.eq.s32.totalorder %s23, 0
      %p100 = por %p98, %p99
      %p101 = scmp.ne.s32.totalorder %s89, %s90
      %p102 = scmp.eq.s32.totalorder %s24, 1
      %p103 = por %p101, %p102
      %p105 = scmp.ne.s32.totalorder %s90, %s104
      %p106 = scmp.eq.s32.totalorder %s24, 0
      %p107 = por %p105, %p106
      %s108 = ssub.s32 %s25, %s37
      %p109 = scmp.eq.s32.totalorder %s108, 0
      %s111 = sadd.s32 %s110, 1
      %s112 = scalar_select %p109, %s110, %s111
      %p115 = pneg %p109
      %p116 = scmp.eq.s32.totalorder %s18, 1
      %p117 = por %p115, %p116
      %p118 = scmp.ne.s32.totalorder %s110, %s113
      %p119 = scmp.eq.s32.totalorder %s18, 0
      %p120 = por %p118, %p119
      %p121 = scmp.ne.s32.totalorder %s110, %s113
      %p122 = scmp.eq.s32.totalorder %s23, 1
      %p123 = por %p121, %p122
      %p124 = scmp.ne.s32.totalorder %s113, %s114
      %p125 = scmp.eq.s32.totalorder %s23, 0
      %p126 = por %p124, %p125
      %p127 = scmp.ne.s32.totalorder %s113, %s114
      %p128 = scmp.eq.s32.totalorder %s24, 1
      %p129 = por %p127, %p128
      %p131 = scmp.ne.s32.totalorder %s114, %s130
      %p132 = scmp.eq.s32.totalorder %s24, 0
      %p133 = por %p131, %p132
      %s134 = ssub.s32 %s25, %s37
      %p135 = scmp.eq.s32.totalorder %s134, 0
      %s137 = sadd.s32 %s136, 1
      %s138 = scalar_select %p135, %s136, %s137
      %p141 = pneg %p135
      %p142 = scmp.eq.s32.totalorder %s18, 1
      %p143 = por %p141, %p142
      %p144 = scmp.ne.s32.totalorder %s136, %s139
      %p145 = scmp.eq.s32.totalorder %s18, 0
      %p146 = por %p144, %p145
      %p147 = scmp.ne.s32.totalorder %s136, %s139
      %p148 = scmp.eq.s32.totalorder %s23, 1
      %p149 = por %p147, %p148
      %p150 = scmp.ne.s32.totalorder %s139, %s140
      %p151 = scmp.eq.s32.totalorder %s23, 0
      %p152 = por %p150, %p151
      %p153 = scmp.ne.s32.totalorder %s139, %s140
      %p154 = scmp.eq.s32.totalorder %s24, 1
      %p155 = por %p153, %p154
      %p157 = scmp.ne.s32.totalorder %s140, %s156
      %p158 = scmp.eq.s32.totalorder %s24, 0
      %p159 = por %p157, %p158
      %s160 = ssub.s32 %s25, %s37
      %p161 = scmp.eq.s32.totalorder %s160, 0
      %s163 = sadd.s32 %s162, 1
      %s164 = scalar_select %p161, %s162, %s163
      %p167 = pneg %p161
      %p168 = scmp.eq.s32.totalorder %s18, 1
      %p169 = por %p167, %p168
      %p170 = scmp.ne.s32.totalorder %s162, %s165
      %p171 = scmp.eq.s32.totalorder %s18, 0
      %p172 = por %p170, %p171
      %p173 = scmp.ne.s32.totalorder %s162, %s165
      %p174 = scmp.eq.s32.totalorder %s23, 1
      %p175 = por %p173, %p174
      %p176 = scmp.ne.s32.totalorder %s165, %s166
      %p177 = scmp.eq.s32.totalorder %s23, 0
      %p178 = por %p176, %p177
      %p179 = scmp.ne.s32.totalorder %s165, %s166
      %p180 = scmp.eq.s32.totalorder %s24, 1
      %p181 = por %p179, %p180
      %p183 = scmp.ne.s32.totalorder %s166, %s182
      %p184 = scmp.eq.s32.totalorder %s24, 0
      %p185 = por %p183, %p184
      %p186 = scmp.le.s32.totalorder 1, %s18
      %p187 = scmp.lt.s32.totalorder %s18, 3
      %p188 = pnand %p186, %p187
      %p189 = pneg %p188
      // Predicated region
      $region9: #{tpu_custom_call.1} parent=5 // pred_check
        _
      $region10: #{tpu_custom_call.1} parent=5 // pred_check_branch
        %191 = sbr.rel (%p188) target = $region12
      $region11: #{tpu_custom_call.1} parent=5 // pred_region
        %s192 = ssub.s32 %s18, 1
        // Predicated region
        $region13: #{tpu_custom_call.1} parent=11 // pred_check
          %p193 = pneg %p79
        $region14: #{tpu_custom_call.1} parent=11 // pred_check_branch
          %195 = sbr.rel (%p193) target = $region16
        $region15: #{tpu_custom_call.1} parent=11 // pred_region
          %s197 = ssub.s32 64, 64
          %198 = vsyncadd [#allocation7], %s197
          %s200 = sshll.u32 [#allocation6], 4
          %s201 = int_to_ptr.vmem [resolvable:$true] %s200
          %203 = dma.hbm_to_vmem [thread:$0]  %s1, 64, %s201, [#allocation7]
        $region16: #{tpu_custom_call.1} parent=11 // pred_fallthru
          _
        // Predicated region
        $region17: #{tpu_custom_call.1} parent=11 // pred_check
          %p204 = pneg %p100
        $region18: #{tpu_custom_call.1} parent=11 // pred_check_branch
          %206 = sbr.rel (%p204) target = $region20
        $region19: #{tpu_custom_call.1} parent=11 // pred_region
          _
        $region20: #{tpu_custom_call.1} parent=11 // pred_fallthru
          _
        // Predicated region
        $region21: #{tpu_custom_call.1} parent=11 // pred_check
          %p207 = pneg %p126
        $region22: #{tpu_custom_call.1} parent=11 // pred_check_branch
          %209 = sbr.rel (%p207) target = $region24
        $region23: #{tpu_custom_call.1} parent=11 // pred_region
          %p210 = scmp.lt.s32.totalorder %s27, 0
          %s211 = scalar_select %p210, %s27, 0
          %s212 = smul.addr %s211, 2
          %s213 = scalar_lea.vmem %s3, %s212
        $region24: #{tpu_custom_call.1} parent=11 // pred_fallthru
          _
      $region12: #{tpu_custom_call.1} parent=5 // pred_fallthru
        _
      %p214 = scmp.lt.s32.totalorder %s18, 2
      // Predicated region
      $region25: #{tpu_custom_call.1} parent=5 // pred_check
        %p215 = pneg %p214
      $region26: #{tpu_custom_call.1} parent=5 // pred_check_branch
        %217 = sbr.rel (%p215) target = $region28
      $region27: #{tpu_custom_call.1} parent=5 // pred_region
        // Predicated region
        $region29: #{tpu_custom_call.1} parent=27 // pred_check
          %p218 = pneg %p52
        $region30: #{tpu_custom_call.1} parent=27 // pred_check_branch
          %220 = sbr.rel (%p218) target = $region32
        $region31: #{tpu_custom_call.1} parent=27 // pred_region
          %s221 = sand.u32 %s42, 1
          %s222 = scalar_lea.sflag [#allocation4], %s221
          %s223 = sand.u32 %s42, 1
          %s224 = smul.addr %s223, 8
          %s225 = scalar_lea.vmem [#allocation3], %s224
          %s226 = smul.u32 2, %s25
          %s228 = ssub.s32 128, 128
          %229 = vsyncadd %s222, %s228
          %s230 = smul.addr %s226, 2
          %s231 = sadd.s32 %s26, %s230
          %s232 = smul.addr %s231, 64
          %s233 = scalar_lea.hbm %s0, %s232
          %s234 = sshll.u32 %s225, 4
          %s235 = int_to_ptr.vmem [resolvable:$true] %s234
          %240 = dma.hbm_to_vmem [thread:$0]  %s233, 128, %s235, %s222, 128, 64, 4
        $region32: #{tpu_custom_call.1} parent=27 // pred_fallthru
          _
      $region28: #{tpu_custom_call.1} parent=5 // pred_fallthru
        _
      %p241 = scmp.le.s32.totalorder 1, %s18
      %p242 = scmp.lt.s32.totalorder %s18, 3
      %p243 = pnand %p241, %p242
      %p244 = pneg %p243
      // Predicated region
      $region33: #{tpu_custom_call.1} parent=5 // pred_check
        _
      $region34: #{tpu_custom_call.1} parent=5 // pred_check_branch
        %246 = sbr.rel (%p243) target = $region36
      $region35: #{tpu_custom_call.1} parent=5 // pred_region
        %s247 = ssub.s32 %s18, 1
        %s248 = sand.u32 %s45, 1
        %s249 = scalar_lea.sflag [#allocation4], %s248
        %s250 = sand.u32 %s45, 1
        %s251 = smul.addr %s250, 8
        %s252 = scalar_lea.vmem [#allocation3], %s251
        // Predicated region
        $region37: #{tpu_custom_call.1} parent=35 // pred_check
          %p253 = pneg %p58
        $region38: #{tpu_custom_call.1} parent=35 // pred_check_branch
          %255 = sbr.rel (%p253) target = $region40
        $region39: #{tpu_custom_call.1} parent=35 // pred_region
          %256 = dma.done %s249, 128
        $region40: #{tpu_custom_call.1} parent=35 // pred_fallthru
          _
        // Predicated region
        $region41: #{tpu_custom_call.1} parent=35 // pred_check
          %p257 = pneg %p79
        $region42: #{tpu_custom_call.1} parent=35 // pred_check_branch
          %259 = sbr.rel (%p257) target = $region44
        $region43: #{tpu_custom_call.1} parent=35 // pred_region
          %260 = dma.done [#allocation7], 64
        $region44: #{tpu_custom_call.1} parent=35 // pred_fallthru
          _
        %s261 = sand.u32 %s45, 1
        %s262 = scalar_lea.sflag [#allocation4], %s261
        %s263 = sand.u32 %s45, 1
        %s264 = smul.addr %s263, 8
        %s265 = scalar_lea.vmem [#allocation3], %s264
        %p266 = pneg %p58
        %p267 = pneg %p55
        %p268 = pneg %p79
        %p269 = pneg %p76
        %p270 = pneg %p100
        %p271 = pneg %p97
        %p272 = scmp.lt.s32.totalorder %s27, 0
        %s273 = scalar_select %p272, %s27, 0
        %s274 = smul.addr %s273, 2
        %s275 = scalar_lea.vmem %s3, %s274
        %p276 = pneg %p126
        %p277 = pneg %p123
        %p278 = pneg %p152
        %p279 = pneg %p149
        %p280 = pneg %p178
        %p281 = pneg %p175
        %s282 = smul.u32 2, %s27
        %p283 = scmp.lt.s32.totalorder %s27, 0
        %s284 = scalar_select %p283, %s27, 0
        %s285 = smul.addr %s284, 2
        %s286 = scalar_lea.vmem %s3, %s285
        %p287 = scmp.eq.s32.totalorder %s28, 0
        // Predicated region
        $region45: #{tpu_custom_call.1} parent=35 // pred_check
          %p288 = pneg %p287
        $region46: #{tpu_custom_call.1} parent=35 // pred_check_branch
          %290 = sbr.rel (%p288) target = $region48
        $region47: #{tpu_custom_call.1} parent=35 // pred_region
          %vm291 = vcmask 25600
          %292 = vst.msk [vmem:[#allocation2] sm:$0x3] %vm291, 0.0
        $region48: #{tpu_custom_call.1} parent=35 // pred_fallthru
          _
        %v293 = vld [vmem:[%s252] sm:$0xf]
        %v294 = vld [vmem:[%s252 + $0x4] sm:$0xf]
        %v295 = vld [vmem:[#allocation2] sm:$0x3]
        %vm296 = vcmask 1043456
        %v297 = vsel %vm296, %v293, 0.0
        %298 = vadd.xlane.f32.xlu0 %v297
        %v299 = vpop.xlane.xlu0 %298
        %v300 = vsel %vm296, %v294, 0.0
        %301 = vadd.xlane.f32.xlu0 %v300
        %v302 = vpop.xlane.xlu0 %301
        %v305 = vlaneseq
        %v306 = vand.u32 %v305, 127
        %v307 = vlaneseq
        %v308 = vshrl.u32 %v307, 7
        %v309 = vsub.s32 %v306, %v308
        %v310 = vrot.slane %v299, %v309
        %v311 = vlaneseq
        %v312 = vshrl.u32 %v311, 7
        %v313 = vsub.s32 %v306, %v312
        %v314 = vrot.slane %v302, %v313
        %vm315 = vcmask 1041409
        %v316 = vsel %vm315, %v314, %v310
        %v318 = vadd.f32 %v295, %v316
        %vm319 = vcmask 25600
        %320 = vst.msk [vmem:[#allocation2] sm:$0x3] %vm319, %v318
        %p321 = scmp.eq.s32.totalorder %s28, 1
        // Predicated region
        $region49: #{tpu_custom_call.1} parent=35 // pred_check
          %p322 = pneg %p321
        $region50: #{tpu_custom_call.1} parent=35 // pred_check_branch
          %324 = sbr.rel (%p322) target = $region52
        $region51: #{tpu_custom_call.1} parent=35 // pred_region
          %v325 = vld [vmem:[#allocation2] sm:$0x3]
          %v326 = vmul.f32 %v325, 0.00390625
          %v327 = vld [vmem:[#allocation6] sm:$0xf]
          %329 = vset.pattern.permute.xlu0 0
          %330 = vperm.xlu0 %329, %v326
          %v331 = vpop.permute.xlu0 %330
          %v333 = vlaneseq
          %v334 = vshrl.u32 %v333, 7
          %v335 = vsub.s32 0, %v334
          %v336 = vrot.slane %v327, %v335
          %v337 = vmul.f32 %v331, %v336
          %338 = vset.pattern.permute.xlu0 1
          %339 = vperm.xlu0 %338, %v326
          %v340 = vpop.permute.xlu0 %339
          %v342 = vlaneseq
          %v343 = vshrl.u32 %v342, 7
          %v344 = vsub.s32 1, %v343
          %v345 = vrot.slane %v327, %v344
          %v346 = vmul.f32 %v340, %v345
          %v347 = vadd.f32 %v337, %v346
          %348 = vset.pattern.permute.xlu0 2
          %349 = vperm.xlu0 %348, %v326
          %v350 = vpop.permute.xlu0 %349
          %v352 = vlaneseq
          %v353 = vshrl.u32 %v352, 7
          %v354 = vsub.s32 2, %v353
          %v355 = vrot.slane %v327, %v354
          %v356 = vmul.f32 %v350, %v355
          %v357 = vadd.f32 %v347, %v356
          %358 = vset.pattern.permute.xlu0 3
          %359 = vperm.xlu0 %358, %v326
          %v360 = vpop.permute.xlu0 %359
          %v362 = vlaneseq
          %v363 = vshrl.u32 %v362, 7
          %v364 = vsub.s32 3, %v363
          %v365 = vrot.slane %v327, %v364
          %v366 = vmul.f32 %v360, %v365
          %v367 = vadd.f32 %v357, %v366
          %v368 = vld [vmem:[%s2] sm:$0x1]
          %v370 = vlaneseq
          %v371 = vshrl.u32 %v370, 7
          %v372 = vsub.s32 0, %v371
          %v373 = vrot.slane %v368, %v372
          %v375 = vadd.f32 %v367, %v373
          %v376 = vld [vmem:[%s286] sm:$0x3]
          %v377 = vmax.f32 %v375, 0.0
          %v378 = vmul.f32 %v375, %v376
          %v379 = vsub.f32 %v377, %v378
          %v380 = vand.u32 2147483647, %v375
          %v381 = vsub.f32 0.0, %v380
          %v382 = vmul.f32 %v381, 1.442695
          %v383 = vpow.pop %v382
          %v384 = vadd.f32 %v383, 1.0
          %v385 = vlog2.pop %v384
          %v386 = vmul.f32 %v385, 0.6931472
          %v387 = vadd.f32 %v379, %v386
          %vm388 = vcmp.lt.s32.totalorder %v306, 8
          %v389 = vsel %vm388, %v387, 0.0
          %vm390 = vcmask 1041408
          %v391 = vsel %vm390, %v389, 0.0
          %392 = vadd.xlane.f32.xlu0 %v391
          %v393 = vpop.xlane.xlu0 %392
          %v394 = vmul.f32 %v393, 0.125
          %v395 = vmax.f32 %v394, 1e-05
          %396 = vst [vmem:[#allocation8] sm:$0x3] %v375
          %397 = vst [vmem:[#allocation9] sm:$0x3] %v395
        $region52: #{tpu_custom_call.1} parent=35 // pred_fallthru
          _
        // Predicated region
        $region53: #{tpu_custom_call.1} parent=35 // pred_check
          %p398 = pneg %p149
        $region54: #{tpu_custom_call.1} parent=35 // pred_check_branch
          %400 = sbr.rel (%p398) target = $region56
        $region55: #{tpu_custom_call.1} parent=35 // pred_region
          %s402 = ssub.s32 32, 32
          %403 = vsyncadd [#allocation5], %s402
          %s404 = smul.addr %s27, 32
          %s405 = scalar_lea.hbm %s4, %s404
          %s407 = sshll.u32 [#allocation8], 4
          %s408 = int_to_ptr.vmem [resolvable:$true] %s407
          %410 = dma.vmem_to_hbm [thread:$0]  %s408, 32, %s405, [#allocation5]
        $region56: #{tpu_custom_call.1} parent=35 // pred_fallthru
          _
        // Predicated region
        $region57: #{tpu_custom_call.1} parent=35 // pred_check
          %p411 = pneg %p175
        $region58: #{tpu_custom_call.1} parent=35 // pred_check_branch
          %413 = sbr.rel (%p411) target = $region60
        $region59: #{tpu_custom_call.1} parent=35 // pred_region
          %s415 = ssub.s32 32, 32
          %416 = vsyncadd [#allocation10], %s415
          %s417 = smul.addr %s27, 32
          %s418 = scalar_lea.hbm %s5, %s417
          %s420 = sshll.u32 [#allocation9], 4
          %s421 = int_to_ptr.vmem [resolvable:$true] %s420
          %423 = dma.vmem_to_hbm [thread:$0]  %s421, 32, %s418, [#allocation10]
        $region60: #{tpu_custom_call.1} parent=35 // pred_fallthru
          _
        // Predicated region
        $region61: #{tpu_custom_call.1} parent=35 // pred_check
          %p424 = pneg %p149
        $region62: #{tpu_custom_call.1} parent=35 // pred_check_branch
          %426 = sbr.rel (%p424) target = $region64
        $region63: #{tpu_custom_call.1} parent=35 // pred_region
          %427 = dma.done [#allocation5], 32
        $region64: #{tpu_custom_call.1} parent=35 // pred_fallthru
          _
        // Predicated region
        $region65: #{tpu_custom_call.1} parent=35 // pred_check
          %p428 = pneg %p175
        $region66: #{tpu_custom_call.1} parent=35 // pred_check_branch
          %430 = sbr.rel (%p428) target = $region68
        $region67: #{tpu_custom_call.1} parent=35 // pred_region
          %431 = dma.done [#allocation10], 32
        $region68: #{tpu_custom_call.1} parent=35 // pred_fallthru
          _
      $region36: #{tpu_custom_call.1} parent=5 // pred_fallthru
        _
      %p432 = scmp.le.s32.totalorder 2, %s18
      // Predicated region
      $region69: #{tpu_custom_call.1} parent=5 // pred_check
        %p433 = pneg %p432
      $region70: #{tpu_custom_call.1} parent=5 // pred_check_branch
        %435 = sbr.rel (%p433) target = $region72
      $region71: #{tpu_custom_call.1} parent=5 // pred_region
        %s436 = ssub.s32 %s18, 2
      $region72: #{tpu_custom_call.1} parent=5 // pred_fallthru
        _
    $region6: #{tpu_custom_call.1} parent=1 // loop_footer
      %s22 = sadd.s32 1, %s18
    $region7: #{tpu_custom_call.1} parent=1 // loop_footer_branch
      %17 = sbr.rel target = $region3
    $region8: #{tpu_custom_call.1} parent=1 // loop_exit
      _
    %437 = vsyncpa [#allocation4], 1
    %s438 = scalar_lea.sflag [#allocation4], 1
    %439 = vsyncpa %s438, 1
    %440 = vsyncpa [#allocation7], 1
    %441 = vsyncpa [#allocation5], 1
    %s442 = scalar_lea.sflag [#allocation5], 1
    %443 = vsyncpa %s442, 1
    %444 = vsyncpa [#allocation10], 1

</llo_original>
